<compile_context>
chip_gen: v7x
topology: tpu7x:2x2x1
jax: 0.10.0
libtpu: 0.0.40
codegen_flags: <defaults>
</compile_context>

<pallas_src>
import math

import numpy as np

import jax
import jax.numpy as jnp
from jax.experimental import pallas as pl
from jax.experimental.pallas import tpu as pltpu

SCORE_THRESH = 0.05
WEIGHTS = (10.0, 10.0, 5.0, 5.0)
INV_WX, INV_WY, INV_WW, INV_WH = (1.0 / w for w in WEIGHTS)
BBOX_XFORM_CLIP = math.log(1000.0 / 16.0)

_ROW_ALIGN = 32  # sublane packing alignment for int8 (32) / bf16 (16) blocks


def _round_up(x, m):
    return ((x + m - 1) // m) * m


def _postproc_kernel(logits_ref,    # (TILE_N, C) class logits (bf16/f32)
                     deltas_ref,    # (4, TILE_N, C) planar deltas [dx, dy, dw, dh]
                     rowinfo_ref,   # (TILE_N, 6) f32 [x1, y1, x2, y2, w-1, h-1]
                     prob_ref,      # out (TILE_N, C) f32 softmax probs
                     keep_ref,      # out (TILE_N, C) int8 (prob > SCORE_THRESH)
                     boxes_ref):    # out (4, TILE_N, C) f32 planar [x1, y1, x2, y2]
    # ---------------- softmax over classes (lane axis) ----------------
    logits = logits_ref[...].astype(jnp.float32)
    m = jnp.max(logits, axis=-1, keepdims=True)
    e = jnp.exp(logits - m)
    denom = jnp.sum(e, axis=-1, keepdims=True)
    prob = e / denom                       # exact divide: approx recip saves nothing here
    prob_ref[...] = prob
    keep_ref[...] = (prob > SCORE_THRESH).astype(jnp.int8)

    # ---------------- BoxCoder.decode (weights 10, 10, 5, 5) ----------------
    info = rowinfo_ref[...].astype(jnp.float32)
    widths = info[:, 2:3] - info[:, 0:1] + 1.0     # TO_REMOVE = 1
    heights = info[:, 3:4] - info[:, 1:2] + 1.0
    ctr_x = info[:, 0:1] + 0.5 * widths
    ctr_y = info[:, 1:2] + 0.5 * heights
    wm1 = info[:, 4:5]                             # per-row image width  - 1
    hm1 = info[:, 5:6]                             # per-row image height - 1

    dx = deltas_ref[0].astype(jnp.float32) * INV_WX
    dy = deltas_ref[1].astype(jnp.float32) * INV_WY
    dw = jnp.minimum(deltas_ref[2].astype(jnp.float32) * INV_WW, BBOX_XFORM_CLIP)
    dh = jnp.minimum(deltas_ref[3].astype(jnp.float32) * INV_WH, BBOX_XFORM_CLIP)

    pred_ctr_x = dx * widths + ctr_x
    pred_ctr_y = dy * heights + ctr_y
    half_w = 0.5 * jnp.exp(dw) * widths
    half_h = 0.5 * jnp.exp(dh) * heights

    # ---------------- clip_to_image (remove_empty=False) ----------------
    boxes_ref[0, :, :] = jnp.clip(pred_ctr_x - half_w, 0.0, wm1)
    boxes_ref[1, :, :] = jnp.clip(pred_ctr_y - half_h, 0.0, hm1)
    boxes_ref[2, :, :] = jnp.clip(pred_ctr_x + half_w - 1.0, 0.0, wm1)
    boxes_ref[3, :, :] = jnp.clip(pred_ctr_y + half_h - 1.0, 0.0, hm1)


def deinterleave_box_regression(box_regression, num_classes):
    """(N, 4*C) interleaved per-class [dx,dy,dw,dh] -> planar (4, N, C).

    Compatibility helper only: this transpose is an extra HBM pass over the largest
    tensor. Prefer having the box head emit the planar (4, N, C) layout (bf16) directly.
    """
    n = box_regression.shape[0]
    return jnp.transpose(box_regression.reshape(n, num_classes, 4), (2, 0, 1))


def _choose_tile_n(n_rows, num_classes, in_bytes,
                   vmem_budget_bytes=24 * 1024 * 1024, min_grid_steps=8):
    """VMEM-budget-aware row tile: <= ~24 MiB double-buffered working set (v7x-safe),
    while keeping >= min_grid_steps grid steps so both TensorCores pipeline."""
    c_lanes = _round_up(num_classes, 128)          # physical lane padding in VMEM
    per_row = ((1 + 4) * c_lanes * in_bytes        # logits + 4 delta planes (inputs)
               + 128 * 4                           # row_info block (pads to 128 lanes, f32)
               + (1 + 4) * c_lanes * 4             # prob + 4 box planes (f32 outputs)
               + c_lanes)                          # keep (int8 output)
    tile = vmem_budget_bytes // (2 * per_row)      # x2: double-buffered pipeline
    tile = min(tile, max(_ROW_ALIGN, n_rows // min_grid_steps))
    tile = max(_ROW_ALIGN, (tile // _ROW_ALIGN) * _ROW_ALIGN)
    return int(min(tile, _round_up(n_rows, _ROW_ALIGN)))


def postprocess(class_logits, box_deltas, proposals, image_sizes,
                rows_per_image=None, tile_n=None):
    """Box-head post-processing (softmax + box decode + clip + score-threshold mask).

    class_logits: (N, C) f32/bf16 class logits (all images concatenated along N).
    box_deltas:   (4, N, C) planar [dx, dy, dw, dh] f32/bf16 (use
                  deinterleave_box_regression() if you only have the (N, 4C) layout).
    proposals:    (N, 4) xyxy f32 proposal boxes.
    image_sizes:  per-image (width, height), host/static.
    rows_per_image: per-image proposal counts summing to N (host/static); None => 1 image.

    Returns (prob (N_pad, C) f32, boxes (4, N_pad, C) f32 planar [x1, y1, x2, y2],
    keep (N_pad, C) int8).  Outputs are returned with their padded row count N_pad
    (no post-call crop); downstream NMS/filtering must mask rows >= N.
    """
    N, C = class_logits.shape
    assert box_deltas.shape == (4, N, C)
    assert proposals.shape == (N, 4)

    if rows_per_image is None:
        rows_per_image = [N]
    assert int(np.sum(rows_per_image)) == N

    # Per-row clip bounds (w-1, h-1): lets tiles straddle image boundaries, so the whole
    # batch is one pallas_call.  Tiny (N, 6) side-info stream next to the proposals.
    sizes = np.asarray(image_sizes, dtype=np.float32).reshape(len(rows_per_image), 2)
    bounds = np.repeat(sizes - 1.0, np.asarray(rows_per_image, dtype=np.int64), axis=0)
    row_info = jnp.concatenate(
        [proposals.astype(jnp.float32), jnp.asarray(bounds, dtype=jnp.float32)], axis=-1)

    in_bytes = jnp.dtype(class_logits.dtype).itemsize
    if tile_n is None:
        tile_n = _choose_tile_n(N, C, in_bytes)
    tile_n = max(_ROW_ALIGN, (int(tile_n) // _ROW_ALIGN) * _ROW_ALIGN)

    N_pad = _round_up(N, tile_n)
    if N_pad != N:
        # TODO(synk): have the proposal stage emit a tile-aligned row count so these pads
        # (an HBM pass over the deltas) become no-ops.
        class_logits = jnp.pad(class_logits, ((0, N_pad - N), (0, 0)))
        box_deltas = jnp.pad(box_deltas, ((0, 0), (0, N_pad - N), (0, 0)))
        row_info = jnp.pad(row_info, ((0, N_pad - N), (0, 0)))

    grid = (N_pad // tile_n,)
    spec_nc = pl.BlockSpec((tile_n, C), lambda i: (i, 0))
    spec_4nc = pl.BlockSpec((4, tile_n, C), lambda i: (0, i, 0))
    spec_info = pl.BlockSpec((tile_n, 6), lambda i: (i, 0))

    out_shapes = (
        jax.ShapeDtypeStruct((N_pad, C), jnp.float32),      # probs
        jax.ShapeDtypeStruct((N_pad, C), jnp.int8),         # keep (prob > thresh)
        jax.ShapeDtypeStruct((4, N_pad, C), jnp.float32),   # planar decoded boxes
    )
    grid_spec = pltpu.PrefetchScalarGridSpec(
        num_scalar_prefetch=0,
        grid=grid,
        in_specs=[spec_nc, spec_4nc, spec_info],
        out_specs=[spec_nc, spec_nc, spec_4nc],
    )

    elems = N_pad * C
    cost = pl.CostEstimate(
        flops=30 * elems,
        transcendentals=3 * elems,
        bytes_accessed=(5 * elems * in_bytes      # logits + 4 delta planes in
                        + N_pad * 6 * 4           # row_info in
                        + 5 * elems * 4           # prob + 4 box planes out
                        + elems),                 # keep out (int8)
    )

    prob, keep, boxes = pl.pallas_call(
        _postproc_kernel,
        out_shape=out_shapes,
        grid_spec=grid_spec,
        compiler_params=pltpu.CompilerParams(
            dimension_semantics=("parallel",),
            vmem_limit_bytes=32 * 1024 * 1024),   # explicit: v5e default is only 16 MiB
        cost_estimate=cost,
    )(class_logits, box_deltas, row_info)

    return prob, boxes, keep


def _reference(class_logits, box_deltas, proposals, bounds_wm1_hm1):
    """Plain-JAX reference for the same math (sanity check)."""
    prob = jax.nn.softmax(class_logits.astype(jnp.float32), axis=-1)
    d = box_deltas.astype(jnp.float32)
    p = proposals.astype(jnp.float32)
    widths = (p[:, 2] - p[:, 0] + 1.0)[:, None]
    heights = (p[:, 3] - p[:, 1] + 1.0)[:, None]
    ctr_x = p[:, 0][:, None] + 0.5 * widths
    ctr_y = p[:, 1][:, None] + 0.5 * heights
    dx = d[0] / WEIGHTS[0]
    dy = d[1] / WEIGHTS[1]
    dw = jnp.minimum(d[2] / WEIGHTS[2], BBOX_XFORM_CLIP)
    dh = jnp.minimum(d[3] / WEIGHTS[3], BBOX_XFORM_CLIP)
    pcx = dx * widths + ctr_x
    pcy = dy * heights + ctr_y
    pw = jnp.exp(dw) * widths
    ph = jnp.exp(dh) * heights
    wm1 = bounds_wm1_hm1[:, 0][:, None]
    hm1 = bounds_wm1_hm1[:, 1][:, None]
    x1 = jnp.clip(pcx - 0.5 * pw, 0.0, wm1)
    y1 = jnp.clip(pcy - 0.5 * ph, 0.0, hm1)
    x2 = jnp.clip(pcx + 0.5 * pw - 1.0, 0.0, wm1)
    y2 = jnp.clip(pcy + 0.5 * ph - 1.0, 0.0, hm1)
    boxes = jnp.stack([x1, y1, x2, y2], axis=0)
    keep = (prob > SCORE_THRESH).astype(jnp.int8)
    return prob, boxes, keep


if __name__ == "__main__":
    # Small demo: batch of 2 images, 32 proposals each, 8 classes (incl. background).
    C = 8
    IMAGE_SIZES = [(64, 48), (80, 56)]     # (width, height) per image
    ROWS = [32, 32]
    N = int(sum(ROWS))

    key = jax.random.PRNGKey(0)
    k1, k2, k3 = jax.random.split(key, 3)

    # Producer-side tensors.  In production the box head would emit these directly as
    # bf16 in the planar (4, N, C) layout; here we build them once from the interleaved
    # (N, 4C) layout the torch module receives.
    class_logits = jax.random.normal(k1, (N, C), dtype=jnp.float32).astype(jnp.bfloat16)
    box_regression = 0.2 * jax.random.normal(k2, (N, 4 * C), dtype=jnp.float32)
    box_deltas = deinterleave_box_regression(box_regression, C).astype(jnp.bfloat16)

    # Deterministic valid xyxy proposals inside each image.
    wh = np.repeat(np.asarray(IMAGE_SIZES, dtype=np.float32), ROWS, axis=0)  # (N, 2)
    wb = jnp.asarray(wh[:, 0])
    hb = jnp.asarray(wh[:, 1])
    u = jax.random.uniform(k3, (N, 4), dtype=jnp.float32)
    x1p = u[:, 0] * (wb * 0.5)
    y1p = u[:, 1] * (hb * 0.5)
    x2p = x1p + 4.0 + u[:, 2] * (wb * 0.4)
    y2p = y1p + 4.0 + u[:, 3] * (hb * 0.4)
    proposals = jnp.stack([x1p, y1p, x2p, y2p], axis=-1)

    # VMEM-budget formula picks tile_n=32 here -> grid of 2 pipelined steps.
    prob, boxes, keep = postprocess(class_logits, box_deltas, proposals,
                                    IMAGE_SIZES, rows_per_image=ROWS)
    jax.block_until_ready((prob, boxes, keep))

    bounds_ref = jnp.asarray(wh - 1.0, dtype=jnp.float32)
    prob_r, boxes_r, keep_r = _reference(class_logits, box_deltas, proposals, bounds_ref)

    assert prob.shape == (N, C) and boxes.shape == (4, N, C) and keep.shape == (N, C)
    assert keep.dtype == jnp.int8
    assert jnp.allclose(prob, prob_r, atol=1e-4, rtol=1e-4)
    assert jnp.allclose(boxes, boxes_r, atol=1e-3, rtol=1e-4)
    # keep may legitimately differ only where prob is within float rounding of the threshold.
    near_thresh = jnp.abs(prob_r - SCORE_THRESH) < 1e-4
    assert bool(jnp.all((keep == keep_r) | near_thresh))

    print("KERNEL_OK")
</pallas_src>

<mosaic_0001>
module attributes {stable_mosaic.version = 11 : i64} {
  func.func @_postproc_kernel(%arg0: i32, %arg1: memref<32x8xbf16, #tpu.memory_space<vmem>>, %arg2: memref<4x32x8xbf16, #tpu.memory_space<vmem>>, %arg3: memref<32x6xf32, #tpu.memory_space<vmem>>, %arg4: memref<32x8xf32, #tpu.memory_space<vmem>>, %arg5: memref<32x8xi8, #tpu.memory_space<vmem>>, %arg6: memref<4x32x8xf32, #tpu.memory_space<vmem>>) attributes {dimension_semantics = [#tpu.dimension_semantics<parallel>], iteration_bounds = array<i64: 2>, scalar_prefetch = 0 : i64, scratch_operands = 0 : i64, tpu.core_type = #tpu.core_type<tc>, window_params = [{transform_indices = @transform_0, window_bounds = array<i64: 32, 8>}, {transform_indices = @transform_1, window_bounds = array<i64: 4, 32, 8>}, {transform_indices = @transform_2, window_bounds = array<i64: 32, 6>}, {transform_indices = @transform_3, window_bounds = array<i64: 32, 8>}, {transform_indices = @transform_4, window_bounds = array<i64: 32, 8>}, {transform_indices = @transform_5, window_bounds = array<i64: 4, 32, 8>}]} {
    %c0 = arith.constant 0 : index
    %c0_0 = arith.constant 0 : index
    %0 = vector.load %arg1[%c0, %c0_0] : memref<32x8xbf16, #tpu.memory_space<vmem>>, vector<32x8xbf16>
    %1 = arith.extf %0 : vector<32x8xbf16> to vector<32x8xf32>
    %cst = arith.constant dense<0xFF800000> : vector<32xf32>
    %2 = vector.multi_reduction <maximumf>, %1, %cst [1] : vector<32x8xf32> to vector<32xf32>
    %3 = vector.shape_cast %2 : vector<32xf32> to vector<32x1xf32>
    %4 = vector.broadcast %3 : vector<32x1xf32> to vector<32x8xf32>
    %5 = arith.subf %1, %4 : vector<32x8xf32>
    %6 = math.exp %5 : vector<32x8xf32>
    %cst_1 = arith.constant dense<0.000000e+00> : vector<32xf32>
    %7 = vector.multi_reduction <add>, %6, %cst_1 [1] : vector<32x8xf32> to vector<32xf32>
    %8 = vector.shape_cast %7 : vector<32xf32> to vector<32x1xf32>
    %9 = vector.broadcast %8 : vector<32x1xf32> to vector<32x8xf32>
    %10 = arith.divf %6, %9 : vector<32x8xf32>
    %c0_2 = arith.constant 0 : index
    %c0_3 = arith.constant 0 : index
    %11 = vector.load %arg4[%c0_2, %c0_3] : memref<32x8xf32, #tpu.memory_space<vmem>>, vector<32x8xf32>
    tpu.vector_store %arg4[%c0_2, %c0_3], %10 {strides = array<i32>} : memref<32x8xf32, #tpu.memory_space<vmem>>, vector<32x8xf32>,
    %cst_4 = arith.constant 5.000000e-02 : f32
    %12 = vector.broadcast %cst_4 : f32 to vector<32x8xf32>
    %13 = arith.cmpf ogt, %10, %12 : vector<32x8xf32>
    %14 = arith.extui %13 : vector<32x8xi1> to vector<32x8xi8>
    %c0_5 = arith.constant 0 : index
    %c0_6 = arith.constant 0 : index
    %15 = vector.load %arg5[%c0_5, %c0_6] : memref<32x8xi8, #tpu.memory_space<vmem>>, vector<32x8xi8>
    tpu.vector_store %arg5[%c0_5, %c0_6], %14 {strides = array<i32>} : memref<32x8xi8, #tpu.memory_space<vmem>>, vector<32x8xi8>,
    %c0_7 = arith.constant 0 : index
    %c0_8 = arith.constant 0 : index
    %16 = vector.load %arg3[%c0_7, %c0_8] : memref<32x6xf32, #tpu.memory_space<vmem>>, vector<32x6xf32>
    %17 = vector.extract_strided_slice %16 {offsets = [0, 2], sizes = [32, 1], strides = [1, 1]} : vector<32x6xf32> to vector<32x1xf32>
    %18 = vector.extract_strided_slice %16 {offsets = [0, 0], sizes = [32, 1], strides = [1, 1]} : vector<32x6xf32> to vector<32x1xf32>
    %19 = arith.subf %17, %18 : vector<32x1xf32>
    %cst_9 = arith.constant 1.000000e+00 : f32
    %20 = vector.broadcast %cst_9 : f32 to vector<32x1xf32>
    %21 = arith.addf %19, %20 : vector<32x1xf32>
    %22 = vector.extract_strided_slice %16 {offsets = [0, 3], sizes = [32, 1], strides = [1, 1]} : vector<32x6xf32> to vector<32x1xf32>
    %23 = vector.extract_strided_slice %16 {offsets = [0, 1], sizes = [32, 1], strides = [1, 1]} : vector<32x6xf32> to vector<32x1xf32>
    %24 = arith.subf %22, %23 : vector<32x1xf32>
    %cst_10 = arith.constant 1.000000e+00 : f32
    %25 = vector.broadcast %cst_10 : f32 to vector<32x1xf32>
    %26 = arith.addf %24, %25 : vector<32x1xf32>
    %27 = vector.extract_strided_slice %16 {offsets = [0, 0], sizes = [32, 1], strides = [1, 1]} : vector<32x6xf32> to vector<32x1xf32>
    %cst_11 = arith.constant 5.000000e-01 : f32
    %28 = vector.broadcast %cst_11 : f32 to vector<32x1xf32>
    %29 = arith.mulf %28, %21 : vector<32x1xf32>
    %30 = arith.addf %27, %29 : vector<32x1xf32>
    %31 = vector.extract_strided_slice %16 {offsets = [0, 1], sizes = [32, 1], strides = [1, 1]} : vector<32x6xf32> to vector<32x1xf32>
    %cst_12 = arith.constant 5.000000e-01 : f32
    %32 = vector.broadcast %cst_12 : f32 to vector<32x1xf32>
    %33 = arith.mulf %32, %26 : vector<32x1xf32>
    %34 = arith.addf %31, %33 : vector<32x1xf32>
    %35 = vector.extract_strided_slice %16 {offsets = [0, 4], sizes = [32, 1], strides = [1, 1]} : vector<32x6xf32> to vector<32x1xf32>
    %36 = vector.extract_strided_slice %16 {offsets = [0, 5], sizes = [32, 1], strides = [1, 1]} : vector<32x6xf32> to vector<32x1xf32>
    %c0_13 = arith.constant 0 : index
    %c0_14 = arith.constant 0 : index
    %c0_15 = arith.constant 0 : index
    %37 = vector.load %arg2[%c0_13, %c0_14, %c0_15] : memref<4x32x8xbf16, #tpu.memory_space<vmem>>, vector<1x32x8xbf16>
    %38 = vector.shape_cast %37 : vector<1x32x8xbf16> to vector<32x8xbf16>
    %39 = arith.extf %38 : vector<32x8xbf16> to vector<32x8xf32>
    %cst_16 = arith.constant 1.000000e-01 : f32
    %40 = vector.broadcast %cst_16 : f32 to vector<32x8xf32>
    %41 = arith.mulf %39, %40 : vector<32x8xf32>
    %c1 = arith.constant 1 : index
    %c0_17 = arith.constant 0 : index
    %c0_18 = arith.constant 0 : index
    %42 = vector.load %arg2[%c1, %c0_17, %c0_18] : memref<4x32x8xbf16, #tpu.memory_space<vmem>>, vector<1x32x8xbf16>
    %43 = vector.shape_cast %42 : vector<1x32x8xbf16> to vector<32x8xbf16>
    %44 = arith.extf %43 : vector<32x8xbf16> to vector<32x8xf32>
    %cst_19 = arith.constant 1.000000e-01 : f32
    %45 = vector.broadcast %cst_19 : f32 to vector<32x8xf32>
    %46 = arith.mulf %44, %45 : vector<32x8xf32>
    %c2 = arith.constant 2 : index
    %c0_20 = arith.constant 0 : index
    %c0_21 = arith.constant 0 : index
    %47 = vector.load %arg2[%c2, %c0_20, %c0_21] : memref<4x32x8xbf16, #tpu.memory_space<vmem>>, vector<1x32x8xbf16>
    %48 = vector.shape_cast %47 : vector<1x32x8xbf16> to vector<32x8xbf16>
    %49 = arith.extf %48 : vector<32x8xbf16> to vector<32x8xf32>
    %cst_22 = arith.constant 2.000000e-01 : f32
    %50 = vector.broadcast %cst_22 : f32 to vector<32x8xf32>
    %51 = arith.mulf %49, %50 : vector<32x8xf32>
    %cst_23 = arith.constant 4.13516665 : f32
    %52 = vector.broadcast %cst_23 : f32 to vector<32x8xf32>
    %53 = arith.minimumf %51, %52 : vector<32x8xf32>
    %c3 = arith.constant 3 : index
    %c0_24 = arith.constant 0 : index
    %c0_25 = arith.constant 0 : index
    %54 = vector.load %arg2[%c3, %c0_24, %c0_25] : memref<4x32x8xbf16, #tpu.memory_space<vmem>>, vector<1x32x8xbf16>
    %55 = vector.shape_cast %54 : vector<1x32x8xbf16> to vector<32x8xbf16>
    %56 = arith.extf %55 : vector<32x8xbf16> to vector<32x8xf32>
    %cst_26 = arith.constant 2.000000e-01 : f32
    %57 = vector.broadcast %cst_26 : f32 to vector<32x8xf32>
    %58 = arith.mulf %56, %57 : vector<32x8xf32>
    %cst_27 = arith.constant 4.13516665 : f32
    %59 = vector.broadcast %cst_27 : f32 to vector<32x8xf32>
    %60 = arith.minimumf %58, %59 : vector<32x8xf32>
    %61 = vector.broadcast %21 : vector<32x1xf32> to vector<32x8xf32>
    %62 = arith.mulf %41, %61 : vector<32x8xf32>
    %63 = vector.broadcast %30 : vector<32x1xf32> to vector<32x8xf32>
    %64 = arith.addf %62, %63 : vector<32x8xf32>
    %65 = vector.broadcast %26 : vector<32x1xf32> to vector<32x8xf32>
    %66 = arith.mulf %46, %65 : vector<32x8xf32>
    %67 = vector.broadcast %34 : vector<32x1xf32> to vector<32x8xf32>
    %68 = arith.addf %66, %67 : vector<32x8xf32>
    %69 = math.exp %53 : vector<32x8xf32>
    %cst_28 = arith.constant 5.000000e-01 : f32
    %70 = vector.broadcast %cst_28 : f32 to vector<32x8xf32>
    %71 = arith.mulf %70, %69 : vector<32x8xf32>
    %72 = vector.broadcast %21 : vector<32x1xf32> to vector<32x8xf32>
    %73 = arith.mulf %71, %72 : vector<32x8xf32>
    %74 = math.exp %60 : vector<32x8xf32>
    %cst_29 = arith.constant 5.000000e-01 : f32
    %75 = vector.broadcast %cst_29 : f32 to vector<32x8xf32>
    %76 = arith.mulf %75, %74 : vector<32x8xf32>
    %77 = vector.broadcast %26 : vector<32x1xf32> to vector<32x8xf32>
    %78 = arith.mulf %76, %77 : vector<32x8xf32>
    %79 = arith.subf %64, %73 : vector<32x8xf32>
    %cst_30 = arith.constant 0.000000e+00 : f32
    %80 = vector.broadcast %cst_30 : f32 to vector<32x8xf32>
    %81 = arith.maximumf %80, %79 : vector<32x8xf32>
    %82 = vector.broadcast %35 : vector<32x1xf32> to vector<32x8xf32>
    %83 = arith.minimumf %82, %81 : vector<32x8xf32>
    %c0_31 = arith.constant 0 : index
    %c0_32 = arith.constant 0 : index
    %c0_33 = arith.constant 0 : index
    %84 = vector.load %arg6[%c0_31, %c0_32, %c0_33] : memref<4x32x8xf32, #tpu.memory_space<vmem>>, vector<1x32x8xf32>
    %85 = vector.shape_cast %84 : vector<1x32x8xf32> to vector<32x8xf32>
    %86 = vector.shape_cast %83 : vector<32x8xf32> to vector<1x32x8xf32>
    tpu.vector_store %arg6[%c0_31, %c0_32, %c0_33], %86 {strides = array<i32>} : memref<4x32x8xf32, #tpu.memory_space<vmem>>, vector<1x32x8xf32>,
    %87 = arith.subf %68, %78 : vector<32x8xf32>
    %cst_34 = arith.constant 0.000000e+00 : f32
    %88 = vector.broadcast %cst_34 : f32 to vector<32x8xf32>
    %89 = arith.maximumf %88, %87 : vector<32x8xf32>
    %90 = vector.broadcast %36 : vector<32x1xf32> to vector<32x8xf32>
    %91 = arith.minimumf %90, %89 : vector<32x8xf32>
    %c1_35 = arith.constant 1 : index
    %c0_36 = arith.constant 0 : index
    %c0_37 = arith.constant 0 : index
    %92 = vector.load %arg6[%c1_35, %c0_36, %c0_37] : memref<4x32x8xf32, #tpu.memory_space<vmem>>, vector<1x32x8xf32>
    %93 = vector.shape_cast %92 : vector<1x32x8xf32> to vector<32x8xf32>
    %94 = vector.shape_cast %91 : vector<32x8xf32> to vector<1x32x8xf32>
    tpu.vector_store %arg6[%c1_35, %c0_36, %c0_37], %94 {strides = array<i32>} : memref<4x32x8xf32, #tpu.memory_space<vmem>>, vector<1x32x8xf32>,
    %95 = arith.addf %64, %73 : vector<32x8xf32>
    %cst_38 = arith.constant 1.000000e+00 : f32
    %96 = vector.broadcast %cst_38 : f32 to vector<32x8xf32>
    %97 = arith.subf %95, %96 : vector<32x8xf32>
    %cst_39 = arith.constant 0.000000e+00 : f32
    %98 = vector.broadcast %cst_39 : f32 to vector<32x8xf32>
    %99 = arith.maximumf %98, %97 : vector<32x8xf32>
    %100 = vector.broadcast %35 : vector<32x1xf32> to vector<32x8xf32>
    %101 = arith.minimumf %100, %99 : vector<32x8xf32>
    %c2_40 = arith.constant 2 : index
    %c0_41 = arith.constant 0 : index
    %c0_42 = arith.constant 0 : index
    %102 = vector.load %arg6[%c2_40, %c0_41, %c0_42] : memref<4x32x8xf32, #tpu.memory_space<vmem>>, vector<1x32x8xf32>
    %103 = vector.shape_cast %102 : vector<1x32x8xf32> to vector<32x8xf32>
    %104 = vector.shape_cast %101 : vector<32x8xf32> to vector<1x32x8xf32>
    tpu.vector_store %arg6[%c2_40, %c0_41, %c0_42], %104 {strides = array<i32>} : memref<4x32x8xf32, #tpu.memory_space<vmem>>, vector<1x32x8xf32>,
    %105 = arith.addf %68, %78 : vector<32x8xf32>
    %cst_43 = arith.constant 1.000000e+00 : f32
    %106 = vector.broadcast %cst_43 : f32 to vector<32x8xf32>
    %107 = arith.subf %105, %106 : vector<32x8xf32>
    %cst_44 = arith.constant 0.000000e+00 : f32
    %108 = vector.broadcast %cst_44 : f32 to vector<32x8xf32>
    %109 = arith.maximumf %108, %107 : vector<32x8xf32>
    %110 = vector.broadcast %36 : vector<32x1xf32> to vector<32x8xf32>
    %111 = arith.minimumf %110, %109 : vector<32x8xf32>
    %c3_45 = arith.constant 3 : index
    %c0_46 = arith.constant 0 : index
    %c0_47 = arith.constant 0 : index
    %112 = vector.load %arg6[%c3_45, %c0_46, %c0_47] : memref<4x32x8xf32, #tpu.memory_space<vmem>>, vector<1x32x8xf32>
    %113 = vector.shape_cast %112 : vector<1x32x8xf32> to vector<32x8xf32>
    %114 = vector.shape_cast %111 : vector<32x8xf32> to vector<1x32x8xf32>
    tpu.vector_store %arg6[%c3_45, %c0_46, %c0_47], %114 {strides = array<i32>} : memref<4x32x8xf32, #tpu.memory_space<vmem>>, vector<1x32x8xf32>,
    return
  }
  func.func @transform_0(%arg0: i32) -> (i32, i32) {
    %c0_i32 = arith.constant 0 : i32
    %c0_i32_0 = arith.constant 0 : i32
    return %arg0, %c0_i32 : i32, i32
  }
  func.func @transform_1(%arg0: i32) -> (i32, i32, i32) {
    %c0_i32 = arith.constant 0 : i32
    %c0_i32_0 = arith.constant 0 : i32
    %c0_i32_1 = arith.constant 0 : i32
    return %c0_i32, %arg0, %c0_i32_0 : i32, i32, i32
  }
  func.func @transform_2(%arg0: i32) -> (i32, i32) {
    %c0_i32 = arith.constant 0 : i32
    %c0_i32_0 = arith.constant 0 : i32
    return %arg0, %c0_i32 : i32, i32
  }
  func.func @transform_3(%arg0: i32) -> (i32, i32) {
    %c0_i32 = arith.constant 0 : i32
    %c0_i32_0 = arith.constant 0 : i32
    return %arg0, %c0_i32 : i32, i32
  }
  func.func @transform_4(%arg0: i32) -> (i32, i32) {
    %c0_i32 = arith.constant 0 : i32
    %c0_i32_0 = arith.constant 0 : i32
    return %arg0, %c0_i32 : i32, i32
  }
  func.func @transform_5(%arg0: i32) -> (i32, i32, i32) {
    %c0_i32 = arith.constant 0 : i32
    %c0_i32_0 = arith.constant 0 : i32
    %c0_i32_1 = arith.constant 0 : i32
    return %c0_i32, %arg0, %c0_i32_0 : i32, i32, i32
  }
}

</mosaic_0001>

<llo_original>
// kernel: tpu_custom_call.1
$region0: #{tpu_custom_call.1}
  #allocation0 [shape = 'u32[]', space=smem, size = 0x4, offset = 0x4, fixed_abs, tag = 'smem constant byte address 0x4 - core index']
  #allocation1 [shape = 'u32[144,128]{1,0:T(1,128)}', space=vmem, size = 0x12000, scoped, tag = 'internal scratch']
  %s0 = inlined_call_operand.vmem [shape: bf16[64,8], index: 0, kind: input, shape index: {}]
  %s1 = inlined_call_operand.vmem [shape: bf16[4,64,8], index: 1, kind: input, shape index: {}]
  %s2 = inlined_call_operand.vmem [shape: f32[64,6], index: 2, kind: input, shape index: {}]
  %s3 = inlined_call_operand.vmem [shape: f32[64,8], index: 3, kind: output, shape index: {0}]
  %s4 = inlined_call_operand.vmem [shape: s8[64,8], index: 4, kind: output, shape index: {1}]
  %s5 = inlined_call_operand.vmem [shape: f32[4,64,8], index: 5, kind: output, shape index: {2}]
  %6 = xla_tuple %s3, %s4, %s5
  %s7 = sld [smem:[#allocation0]]
  $region136: #{tpu_custom_call.1} parent=0
    _
  %s9 = ssub.s32 1, %s7
  %s10 = scalar_select 0, %s9, %s7
  $region1: #{tpu_custom_call.1} parent=0
    #allocation2 [shape = 'u8[65536]{0}', space=vmem, size = 0x10000, scoped, tag = 'input window, operand 1']
    #allocation3 [shape = 'u8[131072]{0}', space=vmem, size = 0x20000, scoped, tag = 'output window, operand 2']
    loop: start=0, step=1, limit=4
    $region2: #{tpu_custom_call.1} parent=1 // loop_pre_header
      _
    $region3: #{tpu_custom_call.1} parent=1 // loop_header
      %s12 = sphi 0, %s16
      %p13 = scmp.ge.s32.totalorder %s12, 4
      %s22 = sphi 0, %s24
      %s25 = sphi 0, %s22
      %s26 = sphi 0, %s25
      %s42 = sphi 0, %s26
      %s48 = sphi 0, %s50
      %s51 = sphi 0, %s48
      %s52 = sphi 0, %s51
      %s68 = sphi 0, %s52
      %s74 = sphi 0, %s76
      %s77 = sphi 0, %s74
      %s78 = sphi 0, %s77
      %s94 = sphi 0, %s78
      %s100 = sphi 0, %s102
      %s103 = sphi 0, %s100
      %s104 = sphi 0, %s103
      %s120 = sphi 0, %s104
      %s126 = sphi 0, %s128
      %s129 = sphi 0, %s126
      %s130 = sphi 0, %s129
      %s146 = sphi 0, %s130
      %s152 = sphi 0, %s154
      %s155 = sphi 0, %s152
      %s156 = sphi 0, %s155
      %s172 = sphi 0, %s156
    $region4: #{tpu_custom_call.1} parent=1 // loop_header_branch
      %15 = sbr.rel (%p13) target = $region8
    $region5: #{tpu_custom_call.1} parent=1 // loop_body
      %s17 = ssub.s32 %s12, 1
      %s18 = ssub.s32 %s12, 2
      %s19 = sadd.s32 %s12, 1
      %s20 = ssub.s32 %s12, %s19
      %p21 = scmp.eq.s32.totalorder %s20, 0
      %s23 = sadd.s32 %s22, 1
      %s24 = scalar_select %p21, %s22, %s23
      %p27 = pneg %p21
      %p28 = scmp.eq.s32.totalorder %s12, 1
      %p29 = por %p27, %p28
      %p30 = scmp.ne.s32.totalorder %s22, %s25
      %p31 = scmp.eq.s32.totalorder %s12, 0
      %p32 = por %p30, %p31
      %p33 = scmp.ne.s32.totalorder %s22, %s25
      %p34 = scmp.eq.s32.totalorder %s17, 1
      %p35 = por %p33, %p34
      %p36 = scmp.ne.s32.totalorder %s25, %s26
      %p37 = scmp.eq.s32.totalorder %s17, 0
      %p38 = por %p36, %p37
      %p39 = scmp.ne.s32.totalorder %s25, %s26
      %p40 = scmp.eq.s32.totalorder %s18, 1
      %p41 = por %p39, %p40
      %p43 = scmp.ne.s32.totalorder %s26, %s42
      %p44 = scmp.eq.s32.totalorder %s18, 0
      %p45 = por %p43, %p44
      %s46 = ssub.s32 %s12, %s19
      %p47 = scmp.eq.s32.totalorder %s46, 0
      %s49 = sadd.s32 %s48, 1
      %s50 = scalar_select %p47, %s48, %s49
      %p53 = pneg %p47
      %p54 = scmp.eq.s32.totalorder %s12, 1
      %p55 = por %p53, %p54
      %p56 = scmp.ne.s32.totalorder %s48, %s51
      %p57 = scmp.eq.s32.totalorder %s12, 0
      %p58 = por %p56, %p57
      %p59 = scmp.ne.s32.totalorder %s48, %s51
      %p60 = scmp.eq.s32.totalorder %s17, 1
      %p61 = por %p59, %p60
      %p62 = scmp.ne.s32.totalorder %s51, %s52
      %p63 = scmp.eq.s32.totalorder %s17, 0
      %p64 = por %p62, %p63
      %p65 = scmp.ne.s32.totalorder %s51, %s52
      %p66 = scmp.eq.s32.totalorder %s18, 1
      %p67 = por %p65, %p66
      %p69 = scmp.ne.s32.totalorder %s52, %s68
      %p70 = scmp.eq.s32.totalorder %s18, 0
      %p71 = por %p69, %p70
      %s72 = ssub.s32 %s12, %s19
      %p73 = scmp.eq.s32.totalorder %s72, 0
      %s75 = sadd.s32 %s74, 1
      %s76 = scalar_select %p73, %s74, %s75
      %p79 = pneg %p73
      %p80 = scmp.eq.s32.totalorder %s12, 1
      %p81 = por %p79, %p80
      %p82 = scmp.ne.s32.totalorder %s74, %s77
      %p83 = scmp.eq.s32.totalorder %s12, 0
      %p84 = por %p82, %p83
      %p85 = scmp.ne.s32.totalorder %s74, %s77
      %p86 = scmp.eq.s32.totalorder %s17, 1
      %p87 = por %p85, %p86
      %p88 = scmp.ne.s32.totalorder %s77, %s78
      %p89 = scmp.eq.s32.totalorder %s17, 0
      %p90 = por %p88, %p89
      %p91 = scmp.ne.s32.totalorder %s77, %s78
      %p92 = scmp.eq.s32.totalorder %s18, 1
      %p93 = por %p91, %p92
      %p95 = scmp.ne.s32.totalorder %s78, %s94
      %p96 = scmp.eq.s32.totalorder %s18, 0
      %p97 = por %p95, %p96
      %s98 = ssub.s32 %s12, %s19
      %p99 = scmp.eq.s32.totalorder %s98, 0
      %s101 = sadd.s32 %s100, 1
      %s102 = scalar_select %p99, %s100, %s101
      %p105 = pneg %p99
      %p106 = scmp.eq.s32.totalorder %s12, 1
      %p107 = por %p105, %p106
      %p108 = scmp.ne.s32.totalorder %s100, %s103
      %p109 = scmp.eq.s32.totalorder %s12, 0
      %p110 = por %p108, %p109
      %p111 = scmp.ne.s32.totalorder %s100, %s103
      %p112 = scmp.eq.s32.totalorder %s17, 1
      %p113 = por %p111, %p112
      %p114 = scmp.ne.s32.totalorder %s103, %s104
      %p115 = scmp.eq.s32.totalorder %s17, 0
      %p116 = por %p114, %p115
      %p117 = scmp.ne.s32.totalorder %s103, %s104
      %p118 = scmp.eq.s32.totalorder %s18, 1
      %p119 = por %p117, %p118
      %p121 = scmp.ne.s32.totalorder %s104, %s120
      %p122 = scmp.eq.s32.totalorder %s18, 0
      %p123 = por %p121, %p122
      %s124 = ssub.s32 %s12, %s19
      %p125 = scmp.eq.s32.totalorder %s124, 0
      %s127 = sadd.s32 %s126, 1
      %s128 = scalar_select %p125, %s126, %s127
      %p131 = pneg %p125
      %p132 = scmp.eq.s32.totalorder %s12, 1
      %p133 = por %p131, %p132
      %p134 = scmp.ne.s32.totalorder %s126, %s129
      %p135 = scmp.eq.s32.totalorder %s12, 0
      %p136 = por %p134, %p135
      %p137 = scmp.ne.s32.totalorder %s126, %s129
      %p138 = scmp.eq.s32.totalorder %s17, 1
      %p139 = por %p137, %p138
      %p140 = scmp.ne.s32.totalorder %s129, %s130
      %p141 = scmp.eq.s32.totalorder %s17, 0
      %p142 = por %p140, %p141
      %p143 = scmp.ne.s32.totalorder %s129, %s130
      %p144 = scmp.eq.s32.totalorder %s18, 1
      %p145 = por %p143, %p144
      %p147 = scmp.ne.s32.totalorder %s130, %s146
      %p148 = scmp.eq.s32.totalorder %s18, 0
      %p149 = por %p147, %p148
      %s150 = ssub.s32 %s12, %s19
      %p151 = scmp.eq.s32.totalorder %s150, 0
      %s153 = sadd.s32 %s152, 1
      %s154 = scalar_select %p151, %s152, %s153
      %p157 = pneg %p151
      %p158 = scmp.eq.s32.totalorder %s12, 1
      %p159 = por %p157, %p158
      %p160 = scmp.ne.s32.totalorder %s152, %s155
      %p161 = scmp.eq.s32.totalorder %s12, 0
      %p162 = por %p160, %p161
      %p163 = scmp.ne.s32.totalorder %s152, %s155
      %p164 = scmp.eq.s32.totalorder %s17, 1
      %p165 = por %p163, %p164
      %p166 = scmp.ne.s32.totalorder %s155, %s156
      %p167 = scmp.eq.s32.totalorder %s17, 0
      %p168 = por %p166, %p167
      %p169 = scmp.ne.s32.totalorder %s155, %s156
      %p170 = scmp.eq.s32.totalorder %s18, 1
      %p171 = por %p169, %p170
      %p173 = scmp.ne.s32.totalorder %s156, %s172
      %p174 = scmp.eq.s32.totalorder %s18, 0
      %p175 = por %p173, %p174
      %p176 = scmp.le.s32.totalorder 1, %s12
      %p177 = scmp.lt.s32.totalorder %s12, 3
      %p178 = pnand %p176, %p177
      %p179 = pneg %p178
      // Predicated region
      $region9: #{tpu_custom_call.1} parent=5 // pred_check
        _
      $region10: #{tpu_custom_call.1} parent=5 // pred_check_branch
        %181 = sbr.rel (%p178) target = $region12
      $region11: #{tpu_custom_call.1} parent=5 // pred_region
        %s182 = ssub.s32 %s12, 1
      $region12: #{tpu_custom_call.1} parent=5 // pred_fallthru
        _
      %p183 = scmp.lt.s32.totalorder %s12, 2
      // Predicated region
      $region13: #{tpu_custom_call.1} parent=5 // pred_check
        %p184 = pneg %p183
      $region14: #{tpu_custom_call.1} parent=5 // pred_check_branch
        %186 = sbr.rel (%p184) target = $region16
      $region15: #{tpu_custom_call.1} parent=5 // pred_region
        // Predicated region
        $region17: #{tpu_custom_call.1} parent=15 // pred_check
          %p187 = pneg %p32
        $region18: #{tpu_custom_call.1} parent=15 // pred_check_branch
          %189 = sbr.rel (%p187) target = $region20
        $region19: #{tpu_custom_call.1} parent=15 // pred_region
          %s190 = smul.u32 4, %s12
          %p191 = scmp.lt.s32.totalorder %s190, 7
          %s192 = scalar_select %p191, %s190, 7
          %s193 = smul.addr %s192, 4
          %s194 = scalar_lea.vmem %s0, %s193
          %s195 = smul.u32 4, %s12
        $region20: #{tpu_custom_call.1} parent=15 // pred_fallthru
          _
        // Predicated region
        $region21: #{tpu_custom_call.1} parent=15 // pred_check
          %p196 = pneg %p58
        $region22: #{tpu_custom_call.1} parent=15 // pred_check_branch
          %198 = sbr.rel (%p196) target = $region24
        $region23: #{tpu_custom_call.1} parent=15 // pred_region
          %s199 = sand.u32 %s48, 1
          %s200 = sand.u32 %s48, 1
          %s201 = smul.addr %s200, 64
          %s202 = scalar_lea.vmem [#allocation2], %s201
          %s203 = smul.u32 4, %s12
          %s204 = smul.addr %s203, 4
          %s205 = scalar_lea.vmem %s1, %s204
          // Predicated region
          $region25: #{tpu_custom_call.1} parent=23 // pred_check
            _
          $region26: #{tpu_custom_call.1} parent=23 // pred_check_branch
            %207 = sbr.rel (0) target = $region28
          $region27: #{tpu_custom_call.1} parent=23 // pred_region
            // Predicated region
            $region29: #{tpu_custom_call.1} parent=27 // pred_check
              _
            $region30: #{tpu_custom_call.1} parent=27 // pred_check_branch
              %209 = sbr.rel target = $region32
            $region31: #{tpu_custom_call.1} parent=27 // pred_region
              // Predicated region
              $region44: #{tpu_custom_call.1} parent=31 // pred_check
                _
              $region45: #{tpu_custom_call.1} parent=31 // pred_check_branch
                %254 = sbr.rel (0) target = $region47
              $region46: #{tpu_custom_call.1} parent=31 // pred_region
                loop: start=0, step=1, limit=1
                $region48: #{tpu_custom_call.1} parent=46 // loop_pre_header
                  _
                $region49: #{tpu_custom_call.1} parent=46 // loop_header
                  %s256 = sphi 0, %s260
                  %p257 = scmp.ge.s32.totalorder %s256, 1
                  %s261 = sphi %s205, %s205
                  %s262 = sphi %s202, %s202
                $region50: #{tpu_custom_call.1} parent=46 // loop_header_branch
                  %259 = sbr.rel (%p257) target = $region54
                $region51: #{tpu_custom_call.1} parent=46 // loop_body
                  _
                $region52: #{tpu_custom_call.1} parent=46 // loop_footer
                  %s260 = sadd.s32 1, %s256
                $region53: #{tpu_custom_call.1} parent=46 // loop_footer_branch
                  %255 = sbr.rel target = $region49
                $region54: #{tpu_custom_call.1} parent=46 // loop_exit
                  _
                loop: start=0, step=1, limit=1
                $region55: #{tpu_custom_call.1} parent=46 // loop_pre_header
                  _
                $region56: #{tpu_custom_call.1} parent=46 // loop_header
                  %s265 = sphi 0, %s269
                  %p266 = scmp.ge.s32.totalorder %s265, 1
                  %s270 = sphi %s205, %s205
                  %s271 = sphi %s202, %s202
                $region57: #{tpu_custom_call.1} parent=46 // loop_header_branch
                  %268 = sbr.rel (%p266) target = $region61
                $region58: #{tpu_custom_call.1} parent=46 // loop_body
                  %v272 = vld [vmem:[%s270] sm:$0xf]
                  %273 = vst [vmem:[%s271] sm:$0xf] %v272
                  %v274 = vld [vmem:[%s270 + $0x4] sm:$0xf]
                  %275 = vst [vmem:[%s271 + $0x4] sm:$0xf] %v274
                  %v276 = vld [vmem:[%s270 + $0x8] sm:$0xf]
                  %277 = vst [vmem:[%s271 + $0x8] sm:$0xf] %v276
                  %v278 = vld [vmem:[%s270 + $0xc] sm:$0xf]
                  %279 = vst [vmem:[%s271 + $0xc] sm:$0xf] %v278
                  %v280 = vld [vmem:[%s270 + $0x20] sm:$0xf]
                  %281 = vst [vmem:[%s271 + $0x10] sm:$0xf] %v280
                  %v282 = vld [vmem:[%s270 + $0x24] sm:$0xf]
                  %283 = vst [vmem:[%s271 + $0x14] sm:$0xf] %v282
                  %v284 = vld [vmem:[%s270 + $0x28] sm:$0xf]
                  %285 = vst [vmem:[%s271 + $0x18] sm:$0xf] %v284
                  %v286 = vld [vmem:[%s270 + $0x2c] sm:$0xf]
                  %287 = vst [vmem:[%s271 + $0x1c] sm:$0xf] %v286
                  %v288 = vld [vmem:[%s270 + $0x40] sm:$0xf]
                  %289 = vst [vmem:[%s271 + $0x20] sm:$0xf] %v288
                  %v290 = vld [vmem:[%s270 + $0x44] sm:$0xf]
                  %291 = vst [vmem:[%s271 + $0x24] sm:$0xf] %v290
                  %v292 = vld [vmem:[%s270 + $0x48] sm:$0xf]
                  %293 = vst [vmem:[%s271 + $0x28] sm:$0xf] %v292
                  %v294 = vld [vmem:[%s270 + $0x4c] sm:$0xf]
                  %295 = vst [vmem:[%s271 + $0x2c] sm:$0xf] %v294
                  %v296 = vld [vmem:[%s270 + $0x60] sm:$0xf]
                  %297 = vst [vmem:[%s271 + $0x30] sm:$0xf] %v296
                  %v298 = vld [vmem:[%s270 + $0x64] sm:$0xf]
                  %299 = vst [vmem:[%s271 + $0x34] sm:$0xf] %v298
                  %v300 = vld [vmem:[%s270 + $0x68] sm:$0xf]
                  %301 = vst [vmem:[%s271 + $0x38] sm:$0xf] %v300
                  %v302 = vld [vmem:[%s270 + $0x6c] sm:$0xf]
                  %303 = vst [vmem:[%s271 + $0x3c] sm:$0xf] %v302
                $region59: #{tpu_custom_call.1} parent=46 // loop_footer
                  %s269 = sadd.s32 1, %s265
                $region60: #{tpu_custom_call.1} parent=46 // loop_footer_branch
                  %264 = sbr.rel target = $region56
                $region61: #{tpu_custom_call.1} parent=46 // loop_exit
                  _
              $region47: #{tpu_custom_call.1} parent=31 // pred_fallthru
                _
            $region32: #{tpu_custom_call.1} parent=27 // pred_fallthru
              _
            // Predicated region
            $region33: #{tpu_custom_call.1} parent=27 // pred_check
              _
            $region34: #{tpu_custom_call.1} parent=27 // pred_check_branch
              %211 = sbr.rel (0) target = $region36
            $region35: #{tpu_custom_call.1} parent=27 // pred_region
              loop: start=0, step=1, limit=1
              $region37: #{tpu_custom_call.1} parent=35 // loop_pre_header
                _
              $region38: #{tpu_custom_call.1} parent=35 // loop_header
                %s214 = sphi 0, %s218
                %p215 = scmp.ge.s32.totalorder %s214, 1
                %s219 = sphi %s205, %s205
                %s220 = sphi %s202, %s202
              $region39: #{tpu_custom_call.1} parent=35 // loop_header_branch
                %217 = sbr.rel (%p215) target = $region43
              $region40: #{tpu_custom_call.1} parent=35 // loop_body
                %v221 = vld [vmem:[%s219] sm:$0xf]
                %222 = vst [vmem:[%s220] sm:$0xf] %v221
                %v223 = vld [vmem:[%s219 + $0x4] sm:$0xf]
                %224 = vst [vmem:[%s220 + $0x4] sm:$0xf] %v223
                %v225 = vld [vmem:[%s219 + $0x8] sm:$0xf]
                %226 = vst [vmem:[%s220 + $0x8] sm:$0xf] %v225
                %v227 = vld [vmem:[%s219 + $0xc] sm:$0xf]
                %228 = vst [vmem:[%s220 + $0xc] sm:$0xf] %v227
                %v229 = vld [vmem:[%s219 + $0x20] sm:$0xf]
                %230 = vst [vmem:[%s220 + $0x10] sm:$0xf] %v229
                %v231 = vld [vmem:[%s219 + $0x24] sm:$0xf]
                %232 = vst [vmem:[%s220 + $0x14] sm:$0xf] %v231
                %v233 = vld [vmem:[%s219 + $0x28] sm:$0xf]
                %234 = vst [vmem:[%s220 + $0x18] sm:$0xf] %v233
                %v235 = vld [vmem:[%s219 + $0x2c] sm:$0xf]
                %236 = vst [vmem:[%s220 + $0x1c] sm:$0xf] %v235
                %v237 = vld [vmem:[%s219 + $0x40] sm:$0xf]
                %238 = vst [vmem:[%s220 + $0x20] sm:$0xf] %v237
                %v239 = vld [vmem:[%s219 + $0x44] sm:$0xf]
                %240 = vst [vmem:[%s220 + $0x24] sm:$0xf] %v239
                %v241 = vld [vmem:[%s219 + $0x48] sm:$0xf]
                %242 = vst [vmem:[%s220 + $0x28] sm:$0xf] %v241
                %v243 = vld [vmem:[%s219 + $0x4c] sm:$0xf]
                %244 = vst [vmem:[%s220 + $0x2c] sm:$0xf] %v243
                %v245 = vld [vmem:[%s219 + $0x60] sm:$0xf]
                %246 = vst [vmem:[%s220 + $0x30] sm:$0xf] %v245
                %v247 = vld [vmem:[%s219 + $0x64] sm:$0xf]
                %248 = vst [vmem:[%s220 + $0x34] sm:$0xf] %v247
                %v249 = vld [vmem:[%s219 + $0x68] sm:$0xf]
                %250 = vst [vmem:[%s220 + $0x38] sm:$0xf] %v249
                %v251 = vld [vmem:[%s219 + $0x6c] sm:$0xf]
                %252 = vst [vmem:[%s220 + $0x3c] sm:$0xf] %v251
              $region41: #{tpu_custom_call.1} parent=35 // loop_footer
                %s218 = sadd.s32 1, %s214
              $region42: #{tpu_custom_call.1} parent=35 // loop_footer_branch
                %213 = sbr.rel target = $region38
              $region43: #{tpu_custom_call.1} parent=35 // loop_exit
                _
            $region36: #{tpu_custom_call.1} parent=27 // pred_fallthru
              _
          $region28: #{tpu_custom_call.1} parent=23 // pred_fallthru
            _
          %304 = vnop
        $region24: #{tpu_custom_call.1} parent=15 // pred_fallthru
          _
        // Predicated region
        $region62: #{tpu_custom_call.1} parent=15 // pred_check
          %p305 = pneg %p84
        $region63: #{tpu_custom_call.1} parent=15 // pred_check_branch
          %307 = sbr.rel (%p305) target = $region65
        $region64: #{tpu_custom_call.1} parent=15 // pred_region
          %s308 = smul.u32 4, %s12
          %p309 = scmp.lt.s32.totalorder %s308, 7
          %s310 = scalar_select %p309, %s308, 7
          %s311 = smul.addr %s310, 8
          %s312 = scalar_lea.vmem %s2, %s311
          %s313 = smul.u32 4, %s12
        $region65: #{tpu_custom_call.1} parent=15 // pred_fallthru
          _
      $region16: #{tpu_custom_call.1} parent=5 // pred_fallthru
        _
      %p314 = scmp.le.s32.totalorder 1, %s12
      %p315 = scmp.lt.s32.totalorder %s12, 3
      %p316 = pnand %p314, %p315
      %p317 = pneg %p316
      // Predicated region
      $region66: #{tpu_custom_call.1} parent=5 // pred_check
        _
      $region67: #{tpu_custom_call.1} parent=5 // pred_check_branch
        %319 = sbr.rel (%p316) target = $region69
      $region68: #{tpu_custom_call.1} parent=5 // pred_region
        %s320 = ssub.s32 %s12, 1
        %s321 = sand.u32 %s51, 1
        %s322 = sand.u32 %s51, 1
        %s323 = smul.addr %s322, 64
        %s324 = scalar_lea.vmem [#allocation2], %s323
        // Predicated region
        $region70: #{tpu_custom_call.1} parent=68 // pred_check
          %p325 = pneg %p64
        $region71: #{tpu_custom_call.1} parent=68 // pred_check_branch
          %327 = sbr.rel (%p325) target = $region73
        $region72: #{tpu_custom_call.1} parent=68 // pred_region
          _
        $region73: #{tpu_custom_call.1} parent=68 // pred_fallthru
          _
        %s328 = smul.u32 4, %s17
        %p329 = scmp.lt.s32.totalorder %s328, 7
        %s330 = scalar_select %p329, %s328, 7
        %s331 = smul.addr %s330, 4
        %s332 = scalar_lea.vmem %s0, %s331
        %p333 = pneg %p38
        %p334 = pneg %p35
        %s335 = sand.u32 %s51, 1
        %s336 = sand.u32 %s51, 1
        %s337 = smul.addr %s336, 64
        %s338 = scalar_lea.vmem [#allocation2], %s337
        %p339 = pneg %p64
        %p340 = pneg %p61
        %s341 = smul.u32 4, %s17
        %p342 = scmp.lt.s32.totalorder %s341, 7
        %s343 = scalar_select %p342, %s341, 7
        %s344 = smul.addr %s343, 8
        %s345 = scalar_lea.vmem %s2, %s344
        %p346 = pneg %p90
        %p347 = pneg %p87
        %p348 = pneg %p116
        %p349 = pneg %p113
        %s350 = smul.u32 4, %s17
        %p351 = scmp.lt.s32.totalorder %s350, 7
        %s352 = scalar_select %p351, %s350, 7
        %s353 = smul.addr %s352, 8
        %s354 = scalar_lea.vmem %s3, %s353
        %p355 = pneg %p142
        %p356 = pneg %p139
        %s357 = smul.u32 4, %s17
        %p358 = scmp.lt.s32.totalorder %s357, 7
        %s359 = scalar_select %p358, %s357, 7
        %s360 = smul.addr %s359, 2
        %s361 = scalar_lea.vmem %s4, %s360
        %p362 = pneg %p168
        %p363 = pneg %p165
        %s364 = sand.u32 %s155, 1
        %s365 = sand.u32 %s155, 1
        %s366 = smul.addr %s365, 128
        %s367 = scalar_lea.vmem [#allocation3], %s366
        %s368 = smul.u32 4, %s17
        %p369 = scmp.lt.s32.totalorder %s368, 7
        %s370 = scalar_select %p369, %s368, 7
        %s371 = smul.addr %s370, 4
        %s372 = scalar_lea.vmem %s0, %s371
        %s373 = smul.u32 4, %s17
        %s374 = smul.u32 4, %s17
        %s375 = smul.u32 4, %s17
        %p376 = scmp.lt.s32.totalorder %s375, 7
        %s377 = scalar_select %p376, %s375, 7
        %s378 = smul.addr %s377, 8
        %s379 = scalar_lea.vmem %s2, %s378
        %s380 = smul.u32 4, %s17
        %s381 = smul.u32 4, %s17
        %p382 = scmp.lt.s32.totalorder %s381, 7
        %s383 = scalar_select %p382, %s381, 7
        %s384 = smul.addr %s383, 8
        %s385 = scalar_lea.vmem %s3, %s384
        %s386 = smul.u32 4, %s17
        %s387 = smul.u32 4, %s17
        %p388 = scmp.lt.s32.totalorder %s387, 7
        %s389 = scalar_select %p388, %s387, 7
        %s390 = smul.addr %s389, 2
        %s391 = scalar_lea.vmem %s4, %s390
        %s392 = smul.u32 4, %s17
        %s393 = smul.u32 4, %s17
        %v396 = vld [vmem:[%s372] sm:$0xf]
        %v397 = vld [vmem:[%s372 + $0x4] sm:$0xf]
        %v398 = vld [vmem:[%s372 + $0x8] sm:$0xf]
        %v399 = vld [vmem:[%s372 + $0xc] sm:$0xf]
        %v400 = vunpack.c.l.bf16 %v396
        %v401 = vunpack.c.l.bf16 %v397
        %v402 = vunpack.c.l.bf16 %v398
        %v403 = vunpack.c.l.bf16 %v399
        %vm404 = vcmask 64512
        %v405 = vsel %vm404, %v400, -inf
        %406 = vmax.xlane.f32.xlu0 %v405
        %v407 = vpop.xlane.xlu0 %406
        %v408 = vsel %vm404, %v401, -inf
        %409 = vmax.xlane.f32.xlu0 %v408
        %v410 = vpop.xlane.xlu0 %409
        %v411 = vsel %vm404, %v402, -inf
        %412 = vmax.xlane.f32.xlu0 %v411
        %v413 = vpop.xlane.xlu0 %412
        %v414 = vsel %vm404, %v403, -inf
        %415 = vmax.xlane.f32.xlu0 %v414
        %v416 = vpop.xlane.xlu0 %415
        %v417 = vsub.f32 %v400, %v407
        %v418 = vsub.f32 %v401, %v410
        %v419 = vsub.f32 %v402, %v413
        %v420 = vsub.f32 %v403, %v416
        %v421 = vmul.f32 %v417, 1.442695
        %v422 = vpow.pop %v421
        %v423 = vmul.f32 %v418, 1.442695
        %v424 = vpow.pop %v423
        %v425 = vmul.f32 %v419, 1.442695
        %v426 = vpow.pop %v425
        %v427 = vmul.f32 %v420, 1.442695
        %v428 = vpow.pop %v427
        %v429 = vsel %vm404, %v422, 0.0
        %430 = vadd.xlane.f32.xlu0 %v429
        %v431 = vpop.xlane.xlu0 %430
        %v432 = vsel %vm404, %v424, 0.0
        %433 = vadd.xlane.f32.xlu0 %v432
        %v434 = vpop.xlane.xlu0 %433
        %v435 = vsel %vm404, %v426, 0.0
        %436 = vadd.xlane.f32.xlu0 %v435
        %v437 = vpop.xlane.xlu0 %436
        %v438 = vsel %vm404, %v428, 0.0
        %439 = vadd.xlane.f32.xlu0 %v438
        %v440 = vpop.xlane.xlu0 %439
        %v441 = vrcp.pop %v431
        %v442 = vmul.f32 %v422, %v441
        %v443 = vrcp.pop %v434
        %v444 = vmul.f32 %v424, %v443
        %v445 = vrcp.pop %v437
        %v446 = vmul.f32 %v426, %v445
        %v447 = vrcp.pop %v440
        %v448 = vmul.f32 %v428, %v447
        %449 = vst.msk [vmem:[%s385] sm:$0xff] %vm404, %v442
        %450 = vst.msk [vmem:[%s385 + $0x8] sm:$0xff] %vm404, %v444
        %451 = vst.msk [vmem:[%s385 + $0x10] sm:$0xff] %vm404, %v446
        %452 = vst.msk [vmem:[%s385 + $0x18] sm:$0xff] %vm404, %v448
        %vm453 = vcmp.gt.f32.partialorder %v442, 0.05
        %vm454 = vcmp.gt.f32.partialorder %v444, 0.05
        %vm455 = vcmp.gt.f32.partialorder %v446, 0.05
        %vm456 = vcmp.gt.f32.partialorder %v448, 0.05
        %vm457 = vmpackc.low %vm454, %vm453
        %vm458 = vmpackc.low %vm456, %vm455
        %vm459 = vmpackc.even %vm458, %vm457
        %v460 = vsel %vm459, 16843009, 0
        %v461 = vunpack.c.0.s8 %v460
        %v462 = vunpack.c.1.s8 %v460
        %v463 = vunpack.c.2.s8 %v460
        %v464 = vunpack.c.3.s8 %v460
        %v465 = vpack.c.b16 %v461, %v461
        %v466 = vpack.c.b8 %v465, %v465
        %v467 = vpack.c.b16 %v462, %v462
        %v468 = vpack.c.b8 %v467, %v467
        %v469 = vpack.c.b16 %v463, %v463
        %v470 = vpack.c.b8 %v469, %v469
        %v471 = vpack.c.b16 %v464, %v464
        %v472 = vpack.c.b8 %v471, %v471
        %vm473 = vcmask 58368
        %474 = vst.msk [vmem:[%s391] sm:$0x3] %vm473, %v466
        %475 = vst.msk [vmem:[%s391 + $0x2] sm:$0x3] %vm473, %v468
        %476 = vst.msk [vmem:[%s391 + $0x4] sm:$0x3] %vm473, %v470
        %477 = vst.msk [vmem:[%s391 + $0x6] sm:$0x3] %vm473, %v472
        %v478 = vld [vmem:[%s379] sm:$0xff]
        %v479 = vld [vmem:[%s379 + $0x8] sm:$0xff]
        %v480 = vld [vmem:[%s379 + $0x10] sm:$0xff]
        %v481 = vld [vmem:[%s379 + $0x18] sm:$0xff]
        %486 = vrot.lane.b32.xlu0 %v478, 2
        %v487 = vpop.permute.xlu0 %486
        %488 = vrot.lane.b32.xlu0 %v479, 2
        %v489 = vpop.permute.xlu0 %488
        %490 = vrot.lane.b32.xlu0 %v480, 2
        %v491 = vpop.permute.xlu0 %490
        %492 = vrot.lane.b32.xlu0 %v481, 2
        %v493 = vpop.permute.xlu0 %492
        %v498 = vsub.f32 %v478, %v487
        %v499 = vsub.f32 %v479, %v489
        %v500 = vsub.f32 %v480, %v491
        %v501 = vsub.f32 %v481, %v493
        %v502 = vadd.f32 %v498, 1.0
        %v503 = vadd.f32 %v499, 1.0
        %v504 = vadd.f32 %v500, 1.0
        %v505 = vadd.f32 %v501, 1.0
        %v506 = vmul.f32 %v502, 0.5
        %v507 = vmul.f32 %v503, 0.5
        %v508 = vmul.f32 %v504, 0.5
        %v509 = vmul.f32 %v505, 0.5
        %514 = vrot.lane.b32.xlu0 %v506, 126
        %v515 = vpop.permute.xlu0 %514
        %516 = vrot.lane.b32.xlu0 %v507, 126
        %v517 = vpop.permute.xlu0 %516
        %518 = vrot.lane.b32.xlu0 %v508, 126
        %v519 = vpop.permute.xlu0 %518
        %520 = vrot.lane.b32.xlu0 %v509, 126
        %v521 = vpop.permute.xlu0 %520
        %v526 = vadd.f32 %v478, %v515
        %v527 = vadd.f32 %v479, %v517
        %v528 = vadd.f32 %v480, %v519
        %v529 = vadd.f32 %v481, %v521
        %v530 = vld [vmem:[%s324] sm:$0xf]
        %v531 = vld [vmem:[%s324 + $0x4] sm:$0xf]
        %v532 = vld [vmem:[%s324 + $0x8] sm:$0xf]
        %v533 = vld [vmem:[%s324 + $0xc] sm:$0xf]
        %v534 = vunpack.c.l.bf16 %v530
        %v535 = vunpack.c.l.bf16 %v531
        %v536 = vunpack.c.l.bf16 %v532
        %v537 = vunpack.c.l.bf16 %v533
        %v538 = vmul.f32 %v534, 0.1
        %v539 = vmul.f32 %v535, 0.1
        %v540 = vmul.f32 %v536, 0.1
        %v541 = vmul.f32 %v537, 0.1
        %s542 = scalar_lea.vmem %s324, 16 [#allocation2]
        %v543 = vld [vmem:[%s542] sm:$0xf]
        %v544 = vld [vmem:[%s542 + $0x4] sm:$0xf]
        %v545 = vld [vmem:[%s542 + $0x8] sm:$0xf]
        %v546 = vld [vmem:[%s542 + $0xc] sm:$0xf]
        %v547 = vunpack.c.l.bf16 %v543
        %v548 = vunpack.c.l.bf16 %v544
        %v549 = vunpack.c.l.bf16 %v545
        %v550 = vunpack.c.l.bf16 %v546
        %v551 = vmul.f32 %v547, 0.1
        %v552 = vmul.f32 %v548, 0.1
        %v553 = vmul.f32 %v549, 0.1
        %v554 = vmul.f32 %v550, 0.1
        %s555 = scalar_lea.vmem %s324, 32 [#allocation2]
        %v556 = vld [vmem:[%s555] sm:$0xf]
        %v557 = vld [vmem:[%s555 + $0x4] sm:$0xf]
        %v558 = vld [vmem:[%s555 + $0x8] sm:$0xf]
        %v559 = vld [vmem:[%s555 + $0xc] sm:$0xf]
        %v560 = vunpack.c.l.bf16 %v556
        %v561 = vunpack.c.l.bf16 %v557
        %v562 = vunpack.c.l.bf16 %v558
        %v563 = vunpack.c.l.bf16 %v559
        %v564 = vmul.f32 %v560, 0.2
        %v565 = vmul.f32 %v561, 0.2
        %v566 = vmul.f32 %v562, 0.2
        %v567 = vmul.f32 %v563, 0.2
        %v568 = vmin.f32 %v564, 4.1351666
        %v569 = vmin.f32 %v565, 4.1351666
        %v570 = vmin.f32 %v566, 4.1351666
        %v571 = vmin.f32 %v567, 4.1351666
        %s572 = scalar_lea.vmem %s324, 48 [#allocation2]
        %v573 = vld [vmem:[%s572] sm:$0xf]
        %v574 = vld [vmem:[%s572 + $0x4] sm:$0xf]
        %v575 = vld [vmem:[%s572 + $0x8] sm:$0xf]
        %v576 = vld [vmem:[%s572 + $0xc] sm:$0xf]
        %v577 = vunpack.c.l.bf16 %v573
        %v578 = vunpack.c.l.bf16 %v574
        %v579 = vunpack.c.l.bf16 %v575
        %v580 = vunpack.c.l.bf16 %v576
        %v581 = vmul.f32 %v577, 0.2
        %v582 = vmul.f32 %v578, 0.2
        %v583 = vmul.f32 %v579, 0.2
        %v584 = vmul.f32 %v580, 0.2
        %v585 = vmin.f32 %v581, 4.1351666
        %v586 = vmin.f32 %v582, 4.1351666
        %v587 = vmin.f32 %v583, 4.1351666
        %v588 = vmin.f32 %v584, 4.1351666
        %590 = vset.pattern.permute.xlu0 2
        %591 = vperm.xlu0 %590, %v502
        %v592 = vpop.permute.xlu0 %591
        %595 = vset.pattern.permute.xlu0 2
        %596 = vperm.xlu0 %595, %v503
        %v597 = vpop.permute.xlu0 %596
        %600 = vset.pattern.permute.xlu0 2
        %601 = vperm.xlu0 %600, %v504
        %v602 = vpop.permute.xlu0 %601
        %605 = vset.pattern.permute.xlu0 2
        %606 = vperm.xlu0 %605, %v505
        %v607 = vpop.permute.xlu0 %606
        %v609 = vmul.f32 %v538, %v592
        %v610 = vmul.f32 %v539, %v597
        %v611 = vmul.f32 %v540, %v602
        %v612 = vmul.f32 %v541, %v607
        %614 = vset.pattern.permute.xlu0 0
        %615 = vperm.xlu0 %614, %v526
        %v616 = vpop.permute.xlu0 %615
        %619 = vset.pattern.permute.xlu0 0
        %620 = vperm.xlu0 %619, %v527
        %v621 = vpop.permute.xlu0 %620
        %624 = vset.pattern.permute.xlu0 0
        %625 = vperm.xlu0 %624, %v528
        %v626 = vpop.permute.xlu0 %625
        %629 = vset.pattern.permute.xlu0 0
        %630 = vperm.xlu0 %629, %v529
        %v631 = vpop.permute.xlu0 %630
        %v633 = vadd.f32 %v609, %v616
        %v634 = vadd.f32 %v610, %v621
        %v635 = vadd.f32 %v611, %v626
        %v636 = vadd.f32 %v612, %v631
        %637 = vset.pattern.permute.xlu0 3
        %638 = vperm.xlu0 %637, %v502
        %v639 = vpop.permute.xlu0 %638
        %641 = vset.pattern.permute.xlu0 3
        %642 = vperm.xlu0 %641, %v503
        %v643 = vpop.permute.xlu0 %642
        %645 = vset.pattern.permute.xlu0 3
        %646 = vperm.xlu0 %645, %v504
        %v647 = vpop.permute.xlu0 %646
        %649 = vset.pattern.permute.xlu0 3
        %650 = vperm.xlu0 %649, %v505
        %v651 = vpop.permute.xlu0 %650
        %v653 = vmul.f32 %v551, %v639
        %v654 = vmul.f32 %v552, %v643
        %v655 = vmul.f32 %v553, %v647
        %v656 = vmul.f32 %v554, %v651
        %657 = vset.pattern.permute.xlu0 1
        %658 = vperm.xlu0 %657, %v526
        %v659 = vpop.permute.xlu0 %658
        %661 = vset.pattern.permute.xlu0 1
        %662 = vperm.xlu0 %661, %v527
        %v663 = vpop.permute.xlu0 %662
        %665 = vset.pattern.permute.xlu0 1
        %666 = vperm.xlu0 %665, %v528
        %v667 = vpop.permute.xlu0 %666
        %669 = vset.pattern.permute.xlu0 1
        %670 = vperm.xlu0 %669, %v529
        %v671 = vpop.permute.xlu0 %670
        %v673 = vadd.f32 %v653, %v659
        %v674 = vadd.f32 %v654, %v663
        %v675 = vadd.f32 %v655, %v667
        %v676 = vadd.f32 %v656, %v671
        %v677 = vmul.f32 %v568, 1.442695
        %v678 = vpow.pop %v677
        %v679 = vmul.f32 %v569, 1.442695
        %v680 = vpow.pop %v679
        %v681 = vmul.f32 %v570, 1.442695
        %v682 = vpow.pop %v681
        %v683 = vmul.f32 %v571, 1.442695
        %v684 = vpow.pop %v683
        %v685 = vmul.f32 %v678, 0.5
        %v686 = vmul.f32 %v680, 0.5
        %v687 = vmul.f32 %v682, 0.5
        %v688 = vmul.f32 %v684, 0.5
        %v689 = vmul.f32 %v685, %v592
        %v690 = vmul.f32 %v686, %v597
        %v691 = vmul.f32 %v687, %v602
        %v692 = vmul.f32 %v688, %v607
        %v693 = vmul.f32 %v585, 1.442695
        %v694 = vpow.pop %v693
        %v695 = vmul.f32 %v586, 1.442695
        %v696 = vpow.pop %v695
        %v697 = vmul.f32 %v587, 1.442695
        %v698 = vpow.pop %v697
        %v699 = vmul.f32 %v588, 1.442695
        %v700 = vpow.pop %v699
        %v701 = vmul.f32 %v694, 0.5
        %v702 = vmul.f32 %v696, 0.5
        %v703 = vmul.f32 %v698, 0.5
        %v704 = vmul.f32 %v700, 0.5
        %v705 = vmul.f32 %v701, %v639
        %v706 = vmul.f32 %v702, %v643
        %v707 = vmul.f32 %v703, %v647
        %v708 = vmul.f32 %v704, %v651
        %v709 = vsub.f32 %v633, %v689
        %v710 = vsub.f32 %v634, %v690
        %v711 = vsub.f32 %v635, %v691
        %v712 = vsub.f32 %v636, %v692
        %v713 = vmax.f32 %v709, 0.0
        %v714 = vmax.f32 %v710, 0.0
        %v715 = vmax.f32 %v711, 0.0
        %v716 = vmax.f32 %v712, 0.0
        %717 = vset.pattern.permute.xlu0 4
        %718 = vperm.xlu0 %717, %v478
        %v719 = vpop.permute.xlu0 %718
        %721 = vset.pattern.permute.xlu0 4
        %722 = vperm.xlu0 %721, %v479
        %v723 = vpop.permute.xlu0 %722
        %725 = vset.pattern.permute.xlu0 4
        %726 = vperm.xlu0 %725, %v480
        %v727 = vpop.permute.xlu0 %726
        %729 = vset.pattern.permute.xlu0 4
        %730 = vperm.xlu0 %729, %v481
        %v731 = vpop.permute.xlu0 %730
        %v733 = vmin.f32 %v719, %v713
        %v734 = vmin.f32 %v723, %v714
        %v735 = vmin.f32 %v727, %v715
        %v736 = vmin.f32 %v731, %v716
        %737 = vst.msk [vmem:[%s367] sm:$0xff] %vm404, %v733
        %738 = vst.msk [vmem:[%s367 + $0x8] sm:$0xff] %vm404, %v734
        %739 = vst.msk [vmem:[%s367 + $0x10] sm:$0xff] %vm404, %v735
        %740 = vst.msk [vmem:[%s367 + $0x18] sm:$0xff] %vm404, %v736
        %v741 = vsub.f32 %v673, %v705
        %v742 = vsub.f32 %v674, %v706
        %v743 = vsub.f32 %v675, %v707
        %v744 = vsub.f32 %v676, %v708
        %v745 = vmax.f32 %v741, 0.0
        %v746 = vmax.f32 %v742, 0.0
        %v747 = vmax.f32 %v743, 0.0
        %v748 = vmax.f32 %v744, 0.0
        %749 = vset.pattern.permute.xlu0 5
        %750 = vperm.xlu0 %749, %v478
        %v751 = vpop.permute.xlu0 %750
        %753 = vset.pattern.permute.xlu0 5
        %754 = vperm.xlu0 %753, %v479
        %v755 = vpop.permute.xlu0 %754
        %757 = vset.pattern.permute.xlu0 5
        %758 = vperm.xlu0 %757, %v480
        %v759 = vpop.permute.xlu0 %758
        %761 = vset.pattern.permute.xlu0 5
        %762 = vperm.xlu0 %761, %v481
        %v763 = vpop.permute.xlu0 %762
        %v765 = vmin.f32 %v751, %v745
        %v766 = vmin.f32 %v755, %v746
        %v767 = vmin.f32 %v759, %v747
        %v768 = vmin.f32 %v763, %v748
        %s769 = scalar_lea.vmem %s367, 32 [#allocation3]
        %770 = vst.msk [vmem:[%s769] sm:$0xff] %vm404, %v765
        %771 = vst.msk [vmem:[%s769 + $0x8] sm:$0xff] %vm404, %v766
        %772 = vst.msk [vmem:[%s769 + $0x10] sm:$0xff] %vm404, %v767
        %773 = vst.msk [vmem:[%s769 + $0x18] sm:$0xff] %vm404, %v768
        %v774 = vadd.f32 %v633, %v689
        %v775 = vadd.f32 %v634, %v690
        %v776 = vadd.f32 %v635, %v691
        %v777 = vadd.f32 %v636, %v692
        %v778 = vsub.f32 %v774, 1.0
        %v779 = vsub.f32 %v775, 1.0
        %v780 = vsub.f32 %v776, 1.0
        %v781 = vsub.f32 %v777, 1.0
        %v782 = vmax.f32 %v778, 0.0
        %v783 = vmax.f32 %v779, 0.0
        %v784 = vmax.f32 %v780, 0.0
        %v785 = vmax.f32 %v781, 0.0
        %v786 = vmin.f32 %v719, %v782
        %v787 = vmin.f32 %v723, %v783
        %v788 = vmin.f32 %v727, %v784
        %v789 = vmin.f32 %v731, %v785
        %s790 = scalar_lea.vmem %s367, 64 [#allocation3]
        %791 = vst.msk [vmem:[%s790] sm:$0xff] %vm404, %v786
        %792 = vst.msk [vmem:[%s790 + $0x8] sm:$0xff] %vm404, %v787
        %793 = vst.msk [vmem:[%s790 + $0x10] sm:$0xff] %vm404, %v788
        %794 = vst.msk [vmem:[%s790 + $0x18] sm:$0xff] %vm404, %v789
        %v795 = vadd.f32 %v673, %v705
        %v796 = vadd.f32 %v674, %v706
        %v797 = vadd.f32 %v675, %v707
        %v798 = vadd.f32 %v676, %v708
        %v799 = vsub.f32 %v795, 1.0
        %v800 = vsub.f32 %v796, 1.0
        %v801 = vsub.f32 %v797, 1.0
        %v802 = vsub.f32 %v798, 1.0
        %v803 = vmax.f32 %v799, 0.0
        %v804 = vmax.f32 %v800, 0.0
        %v805 = vmax.f32 %v801, 0.0
        %v806 = vmax.f32 %v802, 0.0
        %v807 = vmin.f32 %v751, %v803
        %v808 = vmin.f32 %v755, %v804
        %v809 = vmin.f32 %v759, %v805
        %v810 = vmin.f32 %v763, %v806
        %s811 = scalar_lea.vmem %s367, 96 [#allocation3]
        %812 = vst.msk [vmem:[%s811] sm:$0xff] %vm404, %v807
        %813 = vst.msk [vmem:[%s811 + $0x8] sm:$0xff] %vm404, %v808
        %814 = vst.msk [vmem:[%s811 + $0x10] sm:$0xff] %vm404, %v809
        %815 = vst.msk [vmem:[%s811 + $0x18] sm:$0xff] %vm404, %v810
        %s816 = smul.u32 4, %s17
        %p817 = scmp.lt.s32.totalorder %s816, 7
        %s818 = scalar_select %p817, %s816, 7
        %s819 = smul.addr %s818, 8
        %s820 = scalar_lea.vmem %s3, %s819
        %s821 = smul.u32 4, %s17
        %p822 = scmp.lt.s32.totalorder %s821, 7
        %s823 = scalar_select %p822, %s821, 7
        %s824 = smul.addr %s823, 2
        %s825 = scalar_lea.vmem %s4, %s824
        %s826 = sand.u32 %s155, 1
        %s827 = sand.u32 %s155, 1
        %s828 = smul.addr %s827, 128
        %s829 = scalar_lea.vmem [#allocation3], %s828
        // Predicated region
        $region74: #{tpu_custom_call.1} parent=68 // pred_check
          %p830 = pneg %p113
        $region75: #{tpu_custom_call.1} parent=68 // pred_check_branch
          %832 = sbr.rel (%p830) target = $region77
        $region76: #{tpu_custom_call.1} parent=68 // pred_region
          %s833 = smul.u32 4, %s17
        $region77: #{tpu_custom_call.1} parent=68 // pred_fallthru
          _
        // Predicated region
        $region78: #{tpu_custom_call.1} parent=68 // pred_check
          %p834 = pneg %p139
        $region79: #{tpu_custom_call.1} parent=68 // pred_check_branch
          %836 = sbr.rel (%p834) target = $region81
        $region80: #{tpu_custom_call.1} parent=68 // pred_region
          %s837 = smul.u32 4, %s17
        $region81: #{tpu_custom_call.1} parent=68 // pred_fallthru
          _
        // Predicated region
        $region82: #{tpu_custom_call.1} parent=68 // pred_check
          %p838 = pneg %p165
        $region83: #{tpu_custom_call.1} parent=68 // pred_check_branch
          %840 = sbr.rel (%p838) target = $region85
        $region84: #{tpu_custom_call.1} parent=68 // pred_region
          %s841 = smul.u32 4, %s17
          %s842 = smul.addr %s841, 8
          %s843 = scalar_lea.vmem %s5, %s842
          // Predicated region
          $region86: #{tpu_custom_call.1} parent=84 // pred_check
            _
          $region87: #{tpu_custom_call.1} parent=84 // pred_check_branch
            %845 = sbr.rel (0) target = $region89
          $region88: #{tpu_custom_call.1} parent=84 // pred_region
            // Predicated region
            $region90: #{tpu_custom_call.1} parent=88 // pred_check
              _
            $region91: #{tpu_custom_call.1} parent=88 // pred_check_branch
              %847 = sbr.rel (0) target = $region93
            $region92: #{tpu_custom_call.1} parent=88 // pred_region
              // Predicated region
              $region105: #{tpu_custom_call.1} parent=92 // pred_check
                _
              $region106: #{tpu_custom_call.1} parent=92 // pred_check_branch
                %892 = sbr.rel (0) target = $region108
              $region107: #{tpu_custom_call.1} parent=92 // pred_region
                loop: start=0, step=1, limit=1
                $region109: #{tpu_custom_call.1} parent=107 // loop_pre_header
                  _
                $region110: #{tpu_custom_call.1} parent=107 // loop_header
                  %s894 = sphi 0, %s898
                  %p895 = scmp.ge.s32.totalorder %s894, 1
                  %s899 = sphi %s829, %s829
                  %s900 = sphi %s843, %s843
                $region111: #{tpu_custom_call.1} parent=107 // loop_header_branch
                  %897 = sbr.rel (%p895) target = $region115
                $region112: #{tpu_custom_call.1} parent=107 // loop_body
                  %v901 = vld [vmem:[%s899] sm:$0xff]
                  %902 = vst [vmem:[%s900] sm:$0xff] %v901
                  %v903 = vld [vmem:[%s899 + $0x8] sm:$0xff]
                  %904 = vst [vmem:[%s900 + $0x8] sm:$0xff] %v903
                  %v905 = vld [vmem:[%s899 + $0x10] sm:$0xff]
                  %906 = vst [vmem:[%s900 + $0x10] sm:$0xff] %v905
                  %v907 = vld [vmem:[%s899 + $0x18] sm:$0xff]
                  %908 = vst [vmem:[%s900 + $0x18] sm:$0xff] %v907
                  %v909 = vld [vmem:[%s899 + $0x20] sm:$0xff]
                  %910 = vst [vmem:[%s900 + $0x40] sm:$0xff] %v909
                  %v911 = vld [vmem:[%s899 + $0x28] sm:$0xff]
                  %912 = vst [vmem:[%s900 + $0x48] sm:$0xff] %v911
                  %v913 = vld [vmem:[%s899 + $0x30] sm:$0xff]
                  %914 = vst [vmem:[%s900 + $0x50] sm:$0xff] %v913
                  %v915 = vld [vmem:[%s899 + $0x38] sm:$0xff]
                  %916 = vst [vmem:[%s900 + $0x58] sm:$0xff] %v915
                  %v917 = vld [vmem:[%s899 + $0x40] sm:$0xff]
                  %918 = vst [vmem:[%s900 + $0x80] sm:$0xff] %v917
                  %v919 = vld [vmem:[%s899 + $0x48] sm:$0xff]
                  %920 = vst [vmem:[%s900 + $0x88] sm:$0xff] %v919
                  %v921 = vld [vmem:[%s899 + $0x50] sm:$0xff]
                  %922 = vst [vmem:[%s900 + $0x90] sm:$0xff] %v921
                  %v923 = vld [vmem:[%s899 + $0x58] sm:$0xff]
                  %924 = vst [vmem:[%s900 + $0x98] sm:$0xff] %v923
                  %v925 = vld [vmem:[%s899 + $0x60] sm:$0xff]
                  %926 = vst [vmem:[%s900 + $0xc0] sm:$0xff] %v925
                  %v927 = vld [vmem:[%s899 + $0x68] sm:$0xff]
                  %928 = vst [vmem:[%s900 + $0xc8] sm:$0xff] %v927
                  %v929 = vld [vmem:[%s899 + $0x70] sm:$0xff]
                  %930 = vst [vmem:[%s900 + $0xd0] sm:$0xff] %v929
                  %v931 = vld [vmem:[%s899 + $0x78] sm:$0xff]
                  %932 = vst [vmem:[%s900 + $0xd8] sm:$0xff] %v931
                $region113: #{tpu_custom_call.1} parent=107 // loop_footer
                  %s898 = sadd.s32 1, %s894
                $region114: #{tpu_custom_call.1} parent=107 // loop_footer_branch
                  %893 = sbr.rel target = $region110
                $region115: #{tpu_custom_call.1} parent=107 // loop_exit
                  _
              $region108: #{tpu_custom_call.1} parent=92 // pred_fallthru
                _
              // Predicated region
              $region116: #{tpu_custom_call.1} parent=92 // pred_check
                _
              $region117: #{tpu_custom_call.1} parent=92 // pred_check_branch
                %934 = sbr.rel target = $region119
              $region118: #{tpu_custom_call.1} parent=92 // pred_region
                _
              $region119: #{tpu_custom_call.1} parent=92 // pred_fallthru
                _
            $region93: #{tpu_custom_call.1} parent=88 // pred_fallthru
              _
            // Predicated region
            $region94: #{tpu_custom_call.1} parent=88 // pred_check
              _
            $region95: #{tpu_custom_call.1} parent=88 // pred_check_branch
              %849 = sbr.rel target = $region97
            $region96: #{tpu_custom_call.1} parent=88 // pred_region
              loop: start=0, step=1, limit=1
              $region98: #{tpu_custom_call.1} parent=96 // loop_pre_header
                _
              $region99: #{tpu_custom_call.1} parent=96 // loop_header
                %s852 = sphi 0, %s856
                %p853 = scmp.ge.s32.totalorder %s852, 1
                %s857 = sphi %s829, %s829
                %s858 = sphi %s843, %s843
              $region100: #{tpu_custom_call.1} parent=96 // loop_header_branch
                %855 = sbr.rel (%p853) target = $region104
              $region101: #{tpu_custom_call.1} parent=96 // loop_body
                %v859 = vld [vmem:[%s857] sm:$0xff]
                %860 = vst [vmem:[%s858] sm:$0xff] %v859
                %v861 = vld [vmem:[%s857 + $0x8] sm:$0xff]
                %862 = vst [vmem:[%s858 + $0x8] sm:$0xff] %v861
                %v863 = vld [vmem:[%s857 + $0x10] sm:$0xff]
                %864 = vst [vmem:[%s858 + $0x10] sm:$0xff] %v863
                %v865 = vld [vmem:[%s857 + $0x18] sm:$0xff]
                %866 = vst [vmem:[%s858 + $0x18] sm:$0xff] %v865
                %v867 = vld [vmem:[%s857 + $0x20] sm:$0xff]
                %868 = vst [vmem:[%s858 + $0x40] sm:$0xff] %v867
                %v869 = vld [vmem:[%s857 + $0x28] sm:$0xff]
                %870 = vst [vmem:[%s858 + $0x48] sm:$0xff] %v869
                %v871 = vld [vmem:[%s857 + $0x30] sm:$0xff]
                %872 = vst [vmem:[%s858 + $0x50] sm:$0xff] %v871
                %v873 = vld [vmem:[%s857 + $0x38] sm:$0xff]
                %874 = vst [vmem:[%s858 + $0x58] sm:$0xff] %v873
                %v875 = vld [vmem:[%s857 + $0x40] sm:$0xff]
                %876 = vst [vmem:[%s858 + $0x80] sm:$0xff] %v875
                %v877 = vld [vmem:[%s857 + $0x48] sm:$0xff]
                %878 = vst [vmem:[%s858 + $0x88] sm:$0xff] %v877
                %v879 = vld [vmem:[%s857 + $0x50] sm:$0xff]
                %880 = vst [vmem:[%s858 + $0x90] sm:$0xff] %v879
                %v881 = vld [vmem:[%s857 + $0x58] sm:$0xff]
                %882 = vst [vmem:[%s858 + $0x98] sm:$0xff] %v881
                %v883 = vld [vmem:[%s857 + $0x60] sm:$0xff]
                %884 = vst [vmem:[%s858 + $0xc0] sm:$0xff] %v883
                %v885 = vld [vmem:[%s857 + $0x68] sm:$0xff]
                %886 = vst [vmem:[%s858 + $0xc8] sm:$0xff] %v885
                %v887 = vld [vmem:[%s857 + $0x70] sm:$0xff]
                %888 = vst [vmem:[%s858 + $0xd0] sm:$0xff] %v887
                %v889 = vld [vmem:[%s857 + $0x78] sm:$0xff]
                %890 = vst [vmem:[%s858 + $0xd8] sm:$0xff] %v889
              $region102: #{tpu_custom_call.1} parent=96 // loop_footer
                %s856 = sadd.s32 1, %s852
              $region103: #{tpu_custom_call.1} parent=96 // loop_footer_branch
                %851 = sbr.rel target = $region99
              $region104: #{tpu_custom_call.1} parent=96 // loop_exit
                _
            $region97: #{tpu_custom_call.1} parent=88 // pred_fallthru
              _
          $region89: #{tpu_custom_call.1} parent=84 // pred_fallthru
            _
          %935 = vnop
        $region85: #{tpu_custom_call.1} parent=68 // pred_fallthru
          _
      $region69: #{tpu_custom_call.1} parent=5 // pred_fallthru
        _
      %p936 = scmp.le.s32.totalorder 2, %s12
      // Predicated region
      $region120: #{tpu_custom_call.1} parent=5 // pred_check
        %p937 = pneg %p936
      $region121: #{tpu_custom_call.1} parent=5 // pred_check_branch
        %939 = sbr.rel (%p937) target = $region123
      $region122: #{tpu_custom_call.1} parent=5 // pred_region
        %s940 = ssub.s32 %s12, 2
        // Predicated region
        $region124: #{tpu_custom_call.1} parent=122 // pred_check
          %p941 = pneg %p119
        $region125: #{tpu_custom_call.1} parent=122 // pred_check_branch
          %943 = sbr.rel (%p941) target = $region127
        $region126: #{tpu_custom_call.1} parent=122 // pred_region
          %s944 = smul.u32 4, %s18
          %p945 = scmp.lt.s32.totalorder %s944, 7
          %s946 = scalar_select %p945, %s944, 7
          %s947 = smul.addr %s946, 8
          %s948 = scalar_lea.vmem %s3, %s947
        $region127: #{tpu_custom_call.1} parent=122 // pred_fallthru
          _
        // Predicated region
        $region128: #{tpu_custom_call.1} parent=122 // pred_check
          %p949 = pneg %p145
        $region129: #{tpu_custom_call.1} parent=122 // pred_check_branch
          %951 = sbr.rel (%p949) target = $region131
        $region130: #{tpu_custom_call.1} parent=122 // pred_region
          %s952 = smul.u32 4, %s18
          %p953 = scmp.lt.s32.totalorder %s952, 7
          %s954 = scalar_select %p953, %s952, 7
          %s955 = smul.addr %s954, 2
          %s956 = scalar_lea.vmem %s4, %s955
        $region131: #{tpu_custom_call.1} parent=122 // pred_fallthru
          _
        // Predicated region
        $region132: #{tpu_custom_call.1} parent=122 // pred_check
          %p957 = pneg %p171
        $region133: #{tpu_custom_call.1} parent=122 // pred_check_branch
          %959 = sbr.rel (%p957) target = $region135
        $region134: #{tpu_custom_call.1} parent=122 // pred_region
          %s960 = sand.u32 %s156, 1
          %s961 = sand.u32 %s156, 1
          %s962 = smul.addr %s961, 128
          %s963 = scalar_lea.vmem [#allocation3], %s962
        $region135: #{tpu_custom_call.1} parent=122 // pred_fallthru
          _
      $region123: #{tpu_custom_call.1} parent=5 // pred_fallthru
        _
    $region6: #{tpu_custom_call.1} parent=1 // loop_footer
      %s16 = sadd.s32 1, %s12
    $region7: #{tpu_custom_call.1} parent=1 // loop_footer_branch
      %11 = sbr.rel target = $region3
    $region8: #{tpu_custom_call.1} parent=1 // loop_exit
      _

</llo_original>
